<compile_context>
chip_gen: v7x
topology: tpu7x:2x2x1
jax: 0.10.0
libtpu: 0.0.40
codegen_flags: <defaults>
</compile_context>

<pallas_src>
import functools

import jax
import jax.numpy as jnp
from jax.experimental import pallas as pl
from jax.experimental.pallas import tpu as pltpu

LANE = 128   # vreg lane width
CHUNK = 32   # rows per inner sub-chunk (4 f32 vregs / operand; int8/bf16 tile-safe)


def _bce_dice_kernel(x_ref, y_ref, out_ref, acc_ref, *, total, bm, beta, eps):
    """acc_ref (4,8,128) f32: [0]=sum bce, [1]=sum p, [2]=sum y, [3]=sum y*p."""
    i = pl.program_id(0)
    nblk = pl.num_programs(0)

    @pl.when(i == 0)
    def _():
        acc_ref[...] = jnp.zeros_like(acc_ref)

    nsub = bm // CHUNK

    def accumulate_block(mask_tail):
        # Fused elementwise + reduction per 32-row sub-chunk: intermediates stay
        # in vregs; four (8,128) partial sums are loop-carried and written to
        # the VMEM accumulator once per block.
        if mask_tail:
            # Local element offset within a chunk (constant across chunks).
            loc = (jax.lax.broadcasted_iota(jnp.int32, (CHUNK, LANE), 0) * LANE
                   + jax.lax.broadcasted_iota(jnp.int32, (CHUNK, LANE), 1))
            block_base = i * (bm * LANE)

        def psum(v):
            # (CHUNK,128) -> (CHUNK//8,8,128), reduce leading axis: pure VPU adds.
            return v.reshape(CHUNK // 8, 8, LANE).sum(axis=0)

        def body(c, carry):
            s_bce, s_p, s_y, s_yp = carry
            r0 = pl.multiple_of(c * CHUNK, CHUNK)
            x = x_ref[pl.ds(r0, CHUNK), :].astype(jnp.float32)
            y = y_ref[pl.ds(r0, CHUNK), :].astype(jnp.float32)
            if mask_tail:
                # Neutralize elements past `total` (partial-edge-block rows and
                # the lane pad): x -> -1e9 (finite f32) gives e=0, p=0, bce=0;
                # y -> 0. Exact zero contribution, safe even if the garbage
                # contained NaN/Inf bit patterns.
                rem = total - (block_base + c * (CHUNK * LANE))
                valid = loc < rem
                x = jnp.where(valid, x, -1e9)
                y = jnp.where(valid, y, 0.0)
            # One exp per element, shared by sigmoid and the stable BCE log term.
            e = jnp.exp(-jnp.abs(x))
            p = jnp.where(x >= 0.0, 1.0, e) / (1.0 + e)            # sigmoid(x)
            bce = jnp.maximum(x, 0.0) - x * y + jnp.log1p(e)
            return (s_bce + psum(bce), s_p + psum(p),
                    s_y + psum(y), s_yp + psum(y * p))

        zero = jnp.zeros((8, LANE), jnp.float32)
        s_bce, s_p, s_y, s_yp = jax.lax.fori_loop(0, nsub, body,
                                                  (zero, zero, zero, zero))
        acc_ref[0] += s_bce
        acc_ref[1] += s_p
        acc_ref[2] += s_y
        acc_ref[3] += s_yp

    is_last = i == nblk - 1

    # Hot path: interior blocks are always fully valid -> no masking work.
    @pl.when(jnp.logical_not(is_last))
    def _():
        accumulate_block(mask_tail=False)

    # Final block: mask the tail, then finalize the loss.
    @pl.when(is_last)
    def _():
        accumulate_block(mask_tail=True)
        n = jnp.float32(total)
        bce_mean = jnp.sum(acc_ref[0]) / n
        sum_p = jnp.sum(acc_ref[1])
        sum_y = jnp.sum(acc_ref[2])
        tp = jnp.sum(acc_ref[3])
        fp = sum_p - tp
        fn = sum_y - tp
        b2 = jnp.float32(beta * beta)
        score = ((1.0 + b2) * tp + eps) / ((1.0 + b2) * tp + b2 * fn + fp + eps)
        out_ref[0, 0] = bce_mean + (1.0 - score)


def bce_dice_loss(outputs, annotation, *, beta=1.0, eps=1e-7):
    """outputs: logits NCHW; annotation: targets NCHW (any numeric dtype)."""
    total = int(outputs.size)

    x = outputs.reshape(-1)
    if not jnp.issubdtype(x.dtype, jnp.floating):
        x = x.astype(jnp.float32)

    y = annotation.reshape(-1)
    if (not jnp.issubdtype(y.dtype, jnp.floating)
            and y.dtype not in (jnp.int8, jnp.uint8)):
        # Hard 0/1 labels: stream 1 byte/elem instead of 4 (kernel is HBM-bound).
        y = y.astype(jnp.int8)
    # Soft float labels keep their native dtype (exact semantics).

    rows = pl.cdiv(total, LANE)
    # Block rows: multiple of 32 (int8 / bf16 sublane tiling), capped at 4096
    # -> <=2 MiB f32 x-block, <=8 MiB double-buffered worst case: fits default
    # scoped VMEM on v5e (16 MiB), v6e and v7x without raising vmem_limit_bytes.
    bm = min(4096, ((rows + CHUNK - 1) // CHUNK) * CHUNK)
    rows_alloc = max(rows, bm)           # never let the block exceed the array
    pad = rows_alloc * LANE - total
    if pad:
        # Only pad to the 128-lane boundary (or one block for tiny inputs);
        # zero for the common lane-aligned case, so the hot path never pays a
        # full-array pad copy in HBM. Pad value 0 is fine: the tail is masked
        # in-kernel, not relied upon.
        x = jnp.pad(x, (0, pad))
        y = jnp.pad(y, (0, pad))
    x = x.reshape(rows_alloc, LANE)
    y = y.reshape(rows_alloc, LANE)
    grid = (pl.cdiv(rows_alloc, bm),)

    kernel = functools.partial(_bce_dice_kernel, total=total, bm=bm,
                               beta=float(beta), eps=float(eps))

    cost = pl.CostEstimate(
        flops=14 * total,
        transcendentals=2 * total,
        bytes_accessed=int(x.nbytes) + int(y.nbytes) + 4,
    )

    # TODO(synk): v7x-only follow-ups not taken here: (a) 2-TensorCore split
    # (leading "parallel" grid axis with per-core partial-sum outputs reduced
    # in the wrapper) for ~2x streaming bandwidth; (b) tanh-based sigmoid /
    # approx reciprocal to cut EUP pushes (introduces ~1e-4 rel error, so the
    # exact path is kept to preserve module semantics).
    out = pl.pallas_call(
        kernel,
        out_shape=jax.ShapeDtypeStruct((1, 1), jnp.float32),
        grid_spec=pltpu.PrefetchScalarGridSpec(
            num_scalar_prefetch=0,
            grid=grid,
            in_specs=[
                pl.BlockSpec((bm, LANE), lambda i: (i, 0)),
                pl.BlockSpec((bm, LANE), lambda i: (i, 0)),
            ],
            out_specs=pl.BlockSpec((1, 1), lambda i: (0, 0),
                                   memory_space=pltpu.SMEM),
            scratch_shapes=[pltpu.VMEM((4, 8, LANE), jnp.float32)],
        ),
        compiler_params=pltpu.CompilerParams(
            dimension_semantics=("arbitrary",)),
        cost_estimate=cost,
    )(x, y)
    return out[0, 0]


def _reference(outputs, annotation, beta=1.0, eps=1e-7):
    x = outputs.astype(jnp.float32)
    y = annotation.astype(jnp.float32)
    bce = jnp.mean(jnp.maximum(x, 0.0) - x * y + jnp.log1p(jnp.exp(-jnp.abs(x))))
    p = jax.nn.sigmoid(x)
    tp = jnp.sum(y * p)
    fp = jnp.sum(p) - tp
    fn = jnp.sum(y) - tp
    b2 = beta * beta
    score = ((1 + b2) * tp + eps) / ((1 + b2) * tp + b2 * fn + fp + eps)
    return bce + (1.0 - score)


if __name__ == "__main__":
    key = jax.random.PRNGKey(0)
    k1, k2 = jax.random.split(key)
    # NCHW: batch=2, channels=4, spatial=16x16 (segmentation logits / binary targets)
    outputs = jax.random.normal(k1, (2, 4, 16, 16), dtype=jnp.float32)
    annotation = (jax.random.uniform(k2, (2, 4, 16, 16)) > 0.5).astype(jnp.int32)

    loss = jax.block_until_ready(bce_dice_loss(outputs, annotation))
    ref = _reference(outputs, annotation)
    assert jnp.allclose(loss, ref, rtol=1e-5, atol=1e-5), (loss, ref)
    print("KERNEL_OK")
</pallas_src>

<mosaic_0001>
module attributes {stable_mosaic.version = 11 : i64} {
  func.func @_bce_dice_kernel(%arg0: i32, %arg1: memref<32x128xf32, #tpu.memory_space<vmem>>, %arg2: memref<32x128xi8, #tpu.memory_space<vmem>>, %arg3: memref<1x1xf32, #tpu.memory_space<smem>>, %arg4: memref<4x8x128xf32, #tpu.memory_space<vmem>>) attributes {dimension_semantics = [#tpu.dimension_semantics<arbitrary>], iteration_bounds = array<i64: 1>, scalar_prefetch = 0 : i64, scratch_operands = 1 : i64, tpu.core_type = #tpu.core_type<tc>, window_params = [{transform_indices = @transform_0, window_bounds = array<i64: 32, 128>}, {transform_indices = @transform_1, window_bounds = array<i64: 32, 128>}, {transform_indices = @transform_2, window_bounds = array<i64: 1, 1>}]} {
    %c0_i32 = arith.constant 0 : i32
    %0 = arith.cmpi eq, %arg0, %c0_i32 : i32
    %1 = arith.extui %0 : i1 to i32
    %c0_i32_0 = arith.constant 0 : i32
    %2 = arith.cmpi ne, %1, %c0_i32_0 : i32
    scf.if %2 {
      %cst = arith.constant 0.000000e+00 : f32
      %9 = vector.broadcast %cst : f32 to vector<4x8x128xf32>
      %c0 = arith.constant 0 : index
      %c0_4 = arith.constant 0 : index
      %c0_5 = arith.constant 0 : index
      %10 = vector.load %arg4[%c0, %c0_4, %c0_5] : memref<4x8x128xf32, #tpu.memory_space<vmem>>, vector<4x8x128xf32>
      tpu.vector_store %arg4[%c0, %c0_4, %c0_5], %9 {strides = array<i32>} : memref<4x8x128xf32, #tpu.memory_space<vmem>>, vector<4x8x128xf32>,
    } else {
    }
    %c0_i32_1 = arith.constant 0 : i32
    %3 = arith.cmpi eq, %arg0, %c0_i32_1 : i32
    %true = arith.constant true
    %4 = arith.xori %3, %true : i1
    %5 = arith.extui %4 : i1 to i32
    %c0_i32_2 = arith.constant 0 : i32
    %6 = arith.cmpi ne, %5, %c0_i32_2 : i32
    scf.if %6 {
      %cst = arith.constant 0.000000e+00 : f32
      %9 = vector.broadcast %cst : f32 to vector<8x128xf32>
      %c0_i32_4 = arith.constant 0 : i32
      %c32_i32 = arith.constant 32 : i32
      %10 = arith.muli %c0_i32_4, %c32_i32 : i32
      %11 = tpu.assume_multiple %10, 32 : i32
      %12 = arith.index_cast %11 : i32 to index
      %c0 = arith.constant 0 : index
      %13 = vector.load %arg1[%12, %c0] : memref<32x128xf32, #tpu.memory_space<vmem>>, vector<32x128xf32>
      %14 = arith.index_cast %11 : i32 to index
      %c0_5 = arith.constant 0 : index
      %15 = vector.load %arg2[%14, %c0_5] : memref<32x128xi8, #tpu.memory_space<vmem>>, vector<32x128xi8>
      %16 = arith.sitofp %15 : vector<32x128xi8> to vector<32x128xf32>
      %17 = math.absf %13 : vector<32x128xf32>
      %cst_6 = arith.constant 0.000000e+00 : f32
      %18 = vector.broadcast %cst_6 : f32 to vector<32x128xf32>
      %19 = arith.subf %18, %17 : vector<32x128xf32>
      %20 = math.exp %19 : vector<32x128xf32>
      %cst_7 = arith.constant 0.000000e+00 : f32
      %21 = vector.broadcast %cst_7 : f32 to vector<32x128xf32>
      %22 = arith.cmpf oge, %13, %21 : vector<32x128xf32>
      %cst_8 = arith.constant 1.000000e+00 : f32
      %23 = vector.broadcast %cst_8 : f32 to vector<32x128xf32>
      %24 = arith.select %22, %23, %20 : vector<32x128xi1>, vector<32x128xf32>
      %cst_9 = arith.constant 1.000000e+00 : f32
      %25 = vector.broadcast %cst_9 : f32 to vector<32x128xf32>
      %26 = arith.addf %25, %20 : vector<32x128xf32>
      %27 = arith.divf %24, %26 : vector<32x128xf32>
      %cst_10 = arith.constant 0.000000e+00 : f32
      %28 = vector.broadcast %cst_10 : f32 to vector<32x128xf32>
      %29 = arith.maximumf %13, %28 : vector<32x128xf32>
      %30 = arith.mulf %13, %16 : vector<32x128xf32>
      %31 = arith.subf %29, %30 : vector<32x128xf32>
      %32 = math.log1p %20 : vector<32x128xf32>
      %33 = arith.addf %31, %32 : vector<32x128xf32>
      %34 = vector.shape_cast %33 : vector<32x128xf32> to vector<4x8x128xf32>
      %cst_11 = arith.constant dense<0.000000e+00> : vector<8x128xf32>
      %35 = vector.multi_reduction <add>, %34, %cst_11 [0] : vector<4x8x128xf32> to vector<8x128xf32>
      %36 = arith.addf %9, %35 : vector<8x128xf32>
      %37 = vector.shape_cast %27 : vector<32x128xf32> to vector<4x8x128xf32>
      %cst_12 = arith.constant dense<0.000000e+00> : vector<8x128xf32>
      %38 = vector.multi_reduction <add>, %37, %cst_12 [0] : vector<4x8x128xf32> to vector<8x128xf32>
      %39 = arith.addf %9, %38 : vector<8x128xf32>
      %40 = vector.shape_cast %16 : vector<32x128xf32> to vector<4x8x128xf32>
      %cst_13 = arith.constant dense<0.000000e+00> : vector<8x128xf32>
      %41 = vector.multi_reduction <add>, %40, %cst_13 [0] : vector<4x8x128xf32> to vector<8x128xf32>
      %42 = arith.addf %9, %41 : vector<8x128xf32>
      %43 = arith.mulf %16, %27 : vector<32x128xf32>
      %44 = vector.shape_cast %43 : vector<32x128xf32> to vector<4x8x128xf32>
      %cst_14 = arith.constant dense<0.000000e+00> : vector<8x128xf32>
      %45 = vector.multi_reduction <add>, %44, %cst_14 [0] : vector<4x8x128xf32> to vector<8x128xf32>
      %46 = arith.addf %9, %45 : vector<8x128xf32>
      %c1_i32 = arith.constant 1 : i32
      %c0_15 = arith.constant 0 : index
      %c0_16 = arith.constant 0 : index
      %c0_17 = arith.constant 0 : index
      %47 = vector.load %arg4[%c0_15, %c0_16, %c0_17] : memref<4x8x128xf32, #tpu.memory_space<vmem>>, vector<1x8x128xf32>
      %48 = vector.shape_cast %47 : vector<1x8x128xf32> to vector<8x128xf32>
      %49 = arith.addf %48, %36 : vector<8x128xf32>
      %c0_18 = arith.constant 0 : index
      %c0_19 = arith.constant 0 : index
      %c0_20 = arith.constant 0 : index
      %50 = vector.load %arg4[%c0_18, %c0_19, %c0_20] : memref<4x8x128xf32, #tpu.memory_space<vmem>>, vector<1x8x128xf32>
      %51 = vector.shape_cast %50 : vector<1x8x128xf32> to vector<8x128xf32>
      %52 = vector.shape_cast %49 : vector<8x128xf32> to vector<1x8x128xf32>
      tpu.vector_store %arg4[%c0_18, %c0_19, %c0_20], %52 {strides = array<i32>} : memref<4x8x128xf32, #tpu.memory_space<vmem>>, vector<1x8x128xf32>,
      %c1 = arith.constant 1 : index
      %c0_21 = arith.constant 0 : index
      %c0_22 = arith.constant 0 : index
      %53 = vector.load %arg4[%c1, %c0_21, %c0_22] : memref<4x8x128xf32, #tpu.memory_space<vmem>>, vector<1x8x128xf32>
      %54 = vector.shape_cast %53 : vector<1x8x128xf32> to vector<8x128xf32>
      %55 = arith.addf %54, %39 : vector<8x128xf32>
      %c1_23 = arith.constant 1 : index
      %c0_24 = arith.constant 0 : index
      %c0_25 = arith.constant 0 : index
      %56 = vector.load %arg4[%c1_23, %c0_24, %c0_25] : memref<4x8x128xf32, #tpu.memory_space<vmem>>, vector<1x8x128xf32>
      %57 = vector.shape_cast %56 : vector<1x8x128xf32> to vector<8x128xf32>
      %58 = vector.shape_cast %55 : vector<8x128xf32> to vector<1x8x128xf32>
      tpu.vector_store %arg4[%c1_23, %c0_24, %c0_25], %58 {strides = array<i32>} : memref<4x8x128xf32, #tpu.memory_space<vmem>>, vector<1x8x128xf32>,
      %c2 = arith.constant 2 : index
      %c0_26 = arith.constant 0 : index
      %c0_27 = arith.constant 0 : index
      %59 = vector.load %arg4[%c2, %c0_26, %c0_27] : memref<4x8x128xf32, #tpu.memory_space<vmem>>, vector<1x8x128xf32>
      %60 = vector.shape_cast %59 : vector<1x8x128xf32> to vector<8x128xf32>
      %61 = arith.addf %60, %42 : vector<8x128xf32>
      %c2_28 = arith.constant 2 : index
      %c0_29 = arith.constant 0 : index
      %c0_30 = arith.constant 0 : index
      %62 = vector.load %arg4[%c2_28, %c0_29, %c0_30] : memref<4x8x128xf32, #tpu.memory_space<vmem>>, vector<1x8x128xf32>
      %63 = vector.shape_cast %62 : vector<1x8x128xf32> to vector<8x128xf32>
      %64 = vector.shape_cast %61 : vector<8x128xf32> to vector<1x8x128xf32>
      tpu.vector_store %arg4[%c2_28, %c0_29, %c0_30], %64 {strides = array<i32>} : memref<4x8x128xf32, #tpu.memory_space<vmem>>, vector<1x8x128xf32>,
      %c3 = arith.constant 3 : index
      %c0_31 = arith.constant 0 : index
      %c0_32 = arith.constant 0 : index
      %65 = vector.load %arg4[%c3, %c0_31, %c0_32] : memref<4x8x128xf32, #tpu.memory_space<vmem>>, vector<1x8x128xf32>
      %66 = vector.shape_cast %65 : vector<1x8x128xf32> to vector<8x128xf32>
      %67 = arith.addf %66, %46 : vector<8x128xf32>
      %c3_33 = arith.constant 3 : index
      %c0_34 = arith.constant 0 : index
      %c0_35 = arith.constant 0 : index
      %68 = vector.load %arg4[%c3_33, %c0_34, %c0_35] : memref<4x8x128xf32, #tpu.memory_space<vmem>>, vector<1x8x128xf32>
      %69 = vector.shape_cast %68 : vector<1x8x128xf32> to vector<8x128xf32>
      %70 = vector.shape_cast %67 : vector<8x128xf32> to vector<1x8x128xf32>
      tpu.vector_store %arg4[%c3_33, %c0_34, %c0_35], %70 {strides = array<i32>} : memref<4x8x128xf32, #tpu.memory_space<vmem>>, vector<1x8x128xf32>,
    } else {
    }
    %7 = arith.extui %3 : i1 to i32
    %c0_i32_3 = arith.constant 0 : i32
    %8 = arith.cmpi ne, %7, %c0_i32_3 : i32
    scf.if %8 {
      %9 = tpu.iota {dimensions = array<i32: 0>} : vector<32x128xi32>
      %c128_i32 = arith.constant 128 : i32
      %10 = vector.broadcast %c128_i32 : i32 to vector<32x128xi32>
      %11 = arith.muli %9, %10 : vector<32x128xi32>
      %12 = tpu.iota {dimensions = array<i32: 1>} : vector<32x128xi32>
      %13 = arith.addi %11, %12 : vector<32x128xi32>
      %c4096_i32 = arith.constant 4096 : i32
      %14 = arith.muli %arg0, %c4096_i32 : i32
      %cst = arith.constant 0.000000e+00 : f32
      %15 = vector.broadcast %cst : f32 to vector<8x128xf32>
      %c0_i32_4 = arith.constant 0 : i32
      %c32_i32 = arith.constant 32 : i32
      %16 = arith.muli %c0_i32_4, %c32_i32 : i32
      %17 = tpu.assume_multiple %16, 32 : i32
      %18 = arith.index_cast %17 : i32 to index
      %c0 = arith.constant 0 : index
      %19 = vector.load %arg1[%18, %c0] : memref<32x128xf32, #tpu.memory_space<vmem>>, vector<32x128xf32>
      %20 = arith.index_cast %17 : i32 to index
      %c0_5 = arith.constant 0 : index
      %21 = vector.load %arg2[%20, %c0_5] : memref<32x128xi8, #tpu.memory_space<vmem>>, vector<32x128xi8>
      %22 = arith.sitofp %21 : vector<32x128xi8> to vector<32x128xf32>
      %c4096_i32_6 = arith.constant 4096 : i32
      %23 = arith.muli %c0_i32_4, %c4096_i32_6 : i32
      %24 = arith.addi %14, %23 : i32
      %c2048_i32 = arith.constant 2048 : i32
      %25 = arith.subi %c2048_i32, %24 : i32
      %26 = vector.broadcast %25 : i32 to vector<32x128xi32>
      %27 = arith.cmpi slt, %13, %26 : vector<32x128xi32>
      %cst_7 = arith.constant -1.000000e+09 : f32
      %28 = vector.broadcast %cst_7 : f32 to vector<32x128xf32>
      %29 = arith.select %27, %19, %28 : vector<32x128xi1>, vector<32x128xf32>
      %cst_8 = arith.constant 0.000000e+00 : f32
      %30 = vector.broadcast %cst_8 : f32 to vector<32x128xf32>
      %31 = arith.select %27, %22, %30 : vector<32x128xi1>, vector<32x128xf32>
      %32 = math.absf %29 : vector<32x128xf32>
      %cst_9 = arith.constant 0.000000e+00 : f32
      %33 = vector.broadcast %cst_9 : f32 to vector<32x128xf32>
      %34 = arith.subf %33, %32 : vector<32x128xf32>
      %35 = math.exp %34 : vector<32x128xf32>
      %cst_10 = arith.constant 0.000000e+00 : f32
      %36 = vector.broadcast %cst_10 : f32 to vector<32x128xf32>
      %37 = arith.cmpf oge, %29, %36 : vector<32x128xf32>
      %cst_11 = arith.constant 1.000000e+00 : f32
      %38 = vector.broadcast %cst_11 : f32 to vector<32x128xf32>
      %39 = arith.select %37, %38, %35 : vector<32x128xi1>, vector<32x128xf32>
      %cst_12 = arith.constant 1.000000e+00 : f32
      %40 = vector.broadcast %cst_12 : f32 to vector<32x128xf32>
      %41 = arith.addf %40, %35 : vector<32x128xf32>
      %42 = arith.divf %39, %41 : vector<32x128xf32>
      %cst_13 = arith.constant 0.000000e+00 : f32
      %43 = vector.broadcast %cst_13 : f32 to vector<32x128xf32>
      %44 = arith.maximumf %29, %43 : vector<32x128xf32>
      %45 = arith.mulf %29, %31 : vector<32x128xf32>
      %46 = arith.subf %44, %45 : vector<32x128xf32>
      %47 = math.log1p %35 : vector<32x128xf32>
      %48 = arith.addf %46, %47 : vector<32x128xf32>
      %49 = vector.shape_cast %48 : vector<32x128xf32> to vector<4x8x128xf32>
      %cst_14 = arith.constant dense<0.000000e+00> : vector<8x128xf32>
      %50 = vector.multi_reduction <add>, %49, %cst_14 [0] : vector<4x8x128xf32> to vector<8x128xf32>
      %51 = arith.addf %15, %50 : vector<8x128xf32>
      %52 = vector.shape_cast %42 : vector<32x128xf32> to vector<4x8x128xf32>
      %cst_15 = arith.constant dense<0.000000e+00> : vector<8x128xf32>
      %53 = vector.multi_reduction <add>, %52, %cst_15 [0] : vector<4x8x128xf32> to vector<8x128xf32>
      %54 = arith.addf %15, %53 : vector<8x128xf32>
      %55 = vector.shape_cast %31 : vector<32x128xf32> to vector<4x8x128xf32>
      %cst_16 = arith.constant dense<0.000000e+00> : vector<8x128xf32>
      %56 = vector.multi_reduction <add>, %55, %cst_16 [0] : vector<4x8x128xf32> to vector<8x128xf32>
      %57 = arith.addf %15, %56 : vector<8x128xf32>
      %58 = arith.mulf %31, %42 : vector<32x128xf32>
      %59 = vector.shape_cast %58 : vector<32x128xf32> to vector<4x8x128xf32>
      %cst_17 = arith.constant dense<0.000000e+00> : vector<8x128xf32>
      %60 = vector.multi_reduction <add>, %59, %cst_17 [0] : vector<4x8x128xf32> to vector<8x128xf32>
      %61 = arith.addf %15, %60 : vector<8x128xf32>
      %c1_i32 = arith.constant 1 : i32
      %c0_18 = arith.constant 0 : index
      %c0_19 = arith.constant 0 : index
      %c0_20 = arith.constant 0 : index
      %62 = vector.load %arg4[%c0_18, %c0_19, %c0_20] : memref<4x8x128xf32, #tpu.memory_space<vmem>>, vector<1x8x128xf32>
      %63 = vector.shape_cast %62 : vector<1x8x128xf32> to vector<8x128xf32>
      %64 = arith.addf %63, %51 : vector<8x128xf32>
      %c0_21 = arith.constant 0 : index
      %c0_22 = arith.constant 0 : index
      %c0_23 = arith.constant 0 : index
      %65 = vector.load %arg4[%c0_21, %c0_22, %c0_23] : memref<4x8x128xf32, #tpu.memory_space<vmem>>, vector<1x8x128xf32>
      %66 = vector.shape_cast %65 : vector<1x8x128xf32> to vector<8x128xf32>
      %67 = vector.shape_cast %64 : vector<8x128xf32> to vector<1x8x128xf32>
      tpu.vector_store %arg4[%c0_21, %c0_22, %c0_23], %67 {strides = array<i32>} : memref<4x8x128xf32, #tpu.memory_space<vmem>>, vector<1x8x128xf32>,
      %c1 = arith.constant 1 : index
      %c0_24 = arith.constant 0 : index
      %c0_25 = arith.constant 0 : index
      %68 = vector.load %arg4[%c1, %c0_24, %c0_25] : memref<4x8x128xf32, #tpu.memory_space<vmem>>, vector<1x8x128xf32>
      %69 = vector.shape_cast %68 : vector<1x8x128xf32> to vector<8x128xf32>
      %70 = arith.addf %69, %54 : vector<8x128xf32>
      %c1_26 = arith.constant 1 : index
      %c0_27 = arith.constant 0 : index
      %c0_28 = arith.constant 0 : index
      %71 = vector.load %arg4[%c1_26, %c0_27, %c0_28] : memref<4x8x128xf32, #tpu.memory_space<vmem>>, vector<1x8x128xf32>
      %72 = vector.shape_cast %71 : vector<1x8x128xf32> to vector<8x128xf32>
      %73 = vector.shape_cast %70 : vector<8x128xf32> to vector<1x8x128xf32>
      tpu.vector_store %arg4[%c1_26, %c0_27, %c0_28], %73 {strides = array<i32>} : memref<4x8x128xf32, #tpu.memory_space<vmem>>, vector<1x8x128xf32>,
      %c2 = arith.constant 2 : index
      %c0_29 = arith.constant 0 : index
      %c0_30 = arith.constant 0 : index
      %74 = vector.load %arg4[%c2, %c0_29, %c0_30] : memref<4x8x128xf32, #tpu.memory_space<vmem>>, vector<1x8x128xf32>
      %75 = vector.shape_cast %74 : vector<1x8x128xf32> to vector<8x128xf32>
      %76 = arith.addf %75, %57 : vector<8x128xf32>
      %c2_31 = arith.constant 2 : index
      %c0_32 = arith.constant 0 : index
      %c0_33 = arith.constant 0 : index
      %77 = vector.load %arg4[%c2_31, %c0_32, %c0_33] : memref<4x8x128xf32, #tpu.memory_space<vmem>>, vector<1x8x128xf32>
      %78 = vector.shape_cast %77 : vector<1x8x128xf32> to vector<8x128xf32>
      %79 = vector.shape_cast %76 : vector<8x128xf32> to vector<1x8x128xf32>
      tpu.vector_store %arg4[%c2_31, %c0_32, %c0_33], %79 {strides = array<i32>} : memref<4x8x128xf32, #tpu.memory_space<vmem>>, vector<1x8x128xf32>,
      %c3 = arith.constant 3 : index
      %c0_34 = arith.constant 0 : index
      %c0_35 = arith.constant 0 : index
      %80 = vector.load %arg4[%c3, %c0_34, %c0_35] : memref<4x8x128xf32, #tpu.memory_space<vmem>>, vector<1x8x128xf32>
      %81 = vector.shape_cast %80 : vector<1x8x128xf32> to vector<8x128xf32>
      %82 = arith.addf %81, %61 : vector<8x128xf32>
      %c3_36 = arith.constant 3 : index
      %c0_37 = arith.constant 0 : index
      %c0_38 = arith.constant 0 : index
      %83 = vector.load %arg4[%c3_36, %c0_37, %c0_38] : memref<4x8x128xf32, #tpu.memory_space<vmem>>, vector<1x8x128xf32>
      %84 = vector.shape_cast %83 : vector<1x8x128xf32> to vector<8x128xf32>
      %85 = vector.shape_cast %82 : vector<8x128xf32> to vector<1x8x128xf32>
      tpu.vector_store %arg4[%c3_36, %c0_37, %c0_38], %85 {strides = array<i32>} : memref<4x8x128xf32, #tpu.memory_space<vmem>>, vector<1x8x128xf32>,
      %c0_39 = arith.constant 0 : index
      %c0_40 = arith.constant 0 : index
      %c0_41 = arith.constant 0 : index
      %86 = vector.load %arg4[%c0_39, %c0_40, %c0_41] : memref<4x8x128xf32, #tpu.memory_space<vmem>>, vector<1x8x128xf32>
      %87 = vector.shape_cast %86 : vector<1x8x128xf32> to vector<8x128xf32>
      %88 = vector.shape_cast %87 : vector<8x128xf32> to vector<1x8x128xf32>
      %cst_42 = arith.constant dense<0.000000e+00> : vector<1xf32>
      %89 = vector.multi_reduction <add>, %88, %cst_42 [1, 2] : vector<1x8x128xf32> to vector<1xf32>
      %90 = vector.shape_cast %89 : vector<1xf32> to vector<1x1x1xf32>
      %91 = vector.extract %90[0, 0, 0] : f32 from vector<1x1x1xf32>
      %cst_43 = arith.constant 2.048000e+03 : f32
      %92 = arith.divf %91, %cst_43 : f32
      %c1_44 = arith.constant 1 : index
      %c0_45 = arith.constant 0 : index
      %c0_46 = arith.constant 0 : index
      %93 = vector.load %arg4[%c1_44, %c0_45, %c0_46] : memref<4x8x128xf32, #tpu.memory_space<vmem>>, vector<1x8x128xf32>
      %94 = vector.shape_cast %93 : vector<1x8x128xf32> to vector<8x128xf32>
      %95 = vector.shape_cast %94 : vector<8x128xf32> to vector<1x8x128xf32>
      %cst_47 = arith.constant dense<0.000000e+00> : vector<1xf32>
      %96 = vector.multi_reduction <add>, %95, %cst_47 [1, 2] : vector<1x8x128xf32> to vector<1xf32>
      %97 = vector.shape_cast %96 : vector<1xf32> to vector<1x1x1xf32>
      %98 = vector.extract %97[0, 0, 0] : f32 from vector<1x1x1xf32>
      %c2_48 = arith.constant 2 : index
      %c0_49 = arith.constant 0 : index
      %c0_50 = arith.constant 0 : index
      %99 = vector.load %arg4[%c2_48, %c0_49, %c0_50] : memref<4x8x128xf32, #tpu.memory_space<vmem>>, vector<1x8x128xf32>
      %100 = vector.shape_cast %99 : vector<1x8x128xf32> to vector<8x128xf32>
      %101 = vector.shape_cast %100 : vector<8x128xf32> to vector<1x8x128xf32>
      %cst_51 = arith.constant dense<0.000000e+00> : vector<1xf32>
      %102 = vector.multi_reduction <add>, %101, %cst_51 [1, 2] : vector<1x8x128xf32> to vector<1xf32>
      %103 = vector.shape_cast %102 : vector<1xf32> to vector<1x1x1xf32>
      %104 = vector.extract %103[0, 0, 0] : f32 from vector<1x1x1xf32>
      %c3_52 = arith.constant 3 : index
      %c0_53 = arith.constant 0 : index
      %c0_54 = arith.constant 0 : index
      %105 = vector.load %arg4[%c3_52, %c0_53, %c0_54] : memref<4x8x128xf32, #tpu.memory_space<vmem>>, vector<1x8x128xf32>
      %106 = vector.shape_cast %105 : vector<1x8x128xf32> to vector<8x128xf32>
      %107 = vector.shape_cast %106 : vector<8x128xf32> to vector<1x8x128xf32>
      %cst_55 = arith.constant dense<0.000000e+00> : vector<1xf32>
      %108 = vector.multi_reduction <add>, %107, %cst_55 [1, 2] : vector<1x8x128xf32> to vector<1xf32>
      %109 = vector.shape_cast %108 : vector<1xf32> to vector<1x1x1xf32>
      %110 = vector.extract %109[0, 0, 0] : f32 from vector<1x1x1xf32>
      %111 = arith.subf %98, %110 : f32
      %112 = arith.subf %104, %110 : f32
      %cst_56 = arith.constant 1.000000e+00 : f32
      %cst_57 = arith.constant 1.000000e+00 : f32
      %113 = arith.addf %cst_56, %cst_57 : f32
      %114 = arith.mulf %113, %110 : f32
      %cst_58 = arith.constant 1.000000e-07 : f32
      %115 = arith.addf %114, %cst_58 : f32
      %cst_59 = arith.constant 1.000000e+00 : f32
      %cst_60 = arith.constant 1.000000e+00 : f32
      %116 = arith.addf %cst_59, %cst_60 : f32
      %117 = arith.mulf %116, %110 : f32
      %cst_61 = arith.constant 1.000000e+00 : f32
      %118 = arith.mulf %cst_61, %112 : f32
      %119 = arith.addf %117, %118 : f32
      %120 = arith.addf %119, %111 : f32
      %cst_62 = arith.constant 1.000000e-07 : f32
      %121 = arith.addf %120, %cst_62 : f32
      %122 = arith.divf %115, %121 : f32
      %cst_63 = arith.constant 1.000000e+00 : f32
      %123 = arith.subf %cst_63, %122 : f32
      %124 = arith.addf %92, %123 : f32
      %c0_64 = arith.constant 0 : index
      %c0_65 = arith.constant 0 : index
      %125 = memref.load %arg3[%c0_64, %c0_65] : memref<1x1xf32, #tpu.memory_space<smem>>
      memref.store %124, %arg3[%c0_64, %c0_65] : memref<1x1xf32, #tpu.memory_space<smem>>
    } else {
    }
    return
  }
  func.func @transform_0(%arg0: i32) -> (i32, i32) {
    %c0_i32 = arith.constant 0 : i32
    %c0_i32_0 = arith.constant 0 : i32
    return %arg0, %c0_i32 : i32, i32
  }
  func.func @transform_1(%arg0: i32) -> (i32, i32) {
    %c0_i32 = arith.constant 0 : i32
    %c0_i32_0 = arith.constant 0 : i32
    return %arg0, %c0_i32 : i32, i32
  }
  func.func @transform_2(%arg0: i32) -> (i32, i32) {
    %c0_i32 = arith.constant 0 : i32
    %c0_i32_0 = arith.constant 0 : i32
    %c0_i32_1 = arith.constant 0 : i32
    return %c0_i32, %c0_i32_0 : i32, i32
  }
}

</mosaic_0001>

<llo_original>
// kernel: tpu_custom_call.1
$region0: #{tpu_custom_call.1}
  #allocation0 [shape = 'u32[]', space=smem, size = 0x4, offset = 0x4, fixed_abs, tag = 'smem constant byte address 0x4 - core index']
  #allocation1 [shape = 'u32[144,128]{1,0:T(1,128)}', space=vmem, size = 0x12000, scoped, tag = 'internal scratch']
  #allocation2 [shape = 'f32[4,8,128]{2,1,0:T(8,128)}', space=vmem, size = 0x4000, scoped, tag = 'scratch operand']
  %s0 = inlined_call_operand.hbm [shape: f32[32,128], index: 0, kind: input, shape index: {}]
  %s1 = inlined_call_operand.hbm [shape: s8[32,128], index: 1, kind: input, shape index: {}]
  %s2 = inlined_call_operand.hbm [shape: f32[1,1], index: 2, kind: output, shape index: {}]
  %s3 = sld [smem:[#allocation0]]
  $region38: #{tpu_custom_call.1} parent=0
    _
  %s5 = ssub.s32 1, %s3
  %s6 = scalar_select 0, %s5, %s3
  $region1: #{tpu_custom_call.1} parent=0
    #allocation3 [shape = 'u8[16384]{0}', space=vmem, size = 0x4000, scoped, tag = 'input window, operand 0, single buffered']
    #allocation4 [shape = 's32[1]{0}', space=sflag, size = 0x4, scoped, tag = 'scoped memory for tpu_custom_call.1']
    #allocation5 [shape = 's32[1]{0}', space=sflag, size = 0x4, scoped, tag = 'scoped memory for tpu_custom_call.1']
    #allocation6 [shape = 'u8[4096]{0}', space=vmem, size = 0x1000, scoped, tag = 'input window, operand 1, single buffered']
    #allocation7 [shape = 's32[1]{0}', space=sflag, size = 0x4, scoped, tag = 'scoped memory for tpu_custom_call.1']
    #allocation8 [shape = 'u8[512]{0}', space=smem, size = 0x200, scoped, tag = 'output window, operand 0, single buffered']
    %7 = vsyncpa [#allocation4], 0
    %8 = vsyncpa [#allocation7], 0
    %9 = vsyncpa [#allocation5], 0
    // Predicated region
    $region2: #{tpu_custom_call.1} parent=1 // pred_check
      _
    $region3: #{tpu_custom_call.1} parent=1 // pred_check_branch
      %11 = sbr.rel (0) target = $region5
    $region4: #{tpu_custom_call.1} parent=1 // pred_region
      %s13 = ssub.s32 512, 512
      %14 = vsyncadd [#allocation4], %s13
      %s15 = sshll.u32 [#allocation3], 4
      %s16 = int_to_ptr.vmem [resolvable:$true] %s15
      %21 = dma.hbm_to_vmem [thread:$0]  %s0, 512, %s16, [#allocation4], 128, 128, 8
    $region5: #{tpu_custom_call.1} parent=1 // pred_fallthru
      _
    // Predicated region
    $region6: #{tpu_custom_call.1} parent=1 // pred_check
      _
    $region7: #{tpu_custom_call.1} parent=1 // pred_check_branch
      %23 = sbr.rel (0) target = $region9
    $region8: #{tpu_custom_call.1} parent=1 // pred_region
      %s25 = ssub.s32 128, 128
      %26 = vsyncadd [#allocation7], %s25
      %s28 = sshll.u32 [#allocation6], 4
      %s29 = int_to_ptr.vmem [resolvable:$true] %s28
      %31 = dma.hbm_to_vmem [thread:$0]  %s1, 128, %s29, [#allocation7]
    $region9: #{tpu_custom_call.1} parent=1 // pred_fallthru
      _
    // Predicated region
    $region10: #{tpu_custom_call.1} parent=1 // pred_check
      _
    $region11: #{tpu_custom_call.1} parent=1 // pred_check_branch
      %33 = sbr.rel (0) target = $region13
    $region12: #{tpu_custom_call.1} parent=1 // pred_region
      %34 = dma.done [#allocation4], 512
    $region13: #{tpu_custom_call.1} parent=1 // pred_fallthru
      _
    // Predicated region
    $region14: #{tpu_custom_call.1} parent=1 // pred_check
      _
    $region15: #{tpu_custom_call.1} parent=1 // pred_check_branch
      %36 = sbr.rel (0) target = $region17
    $region16: #{tpu_custom_call.1} parent=1 // pred_region
      %37 = dma.done [#allocation7], 128
    $region17: #{tpu_custom_call.1} parent=1 // pred_fallthru
      _
    %p38 = scmp.eq.s32.totalorder 0, 0
    // Predicated region
    $region18: #{tpu_custom_call.1} parent=1 // pred_check
      %p39 = pneg %p38
    $region19: #{tpu_custom_call.1} parent=1 // pred_check_branch
      %41 = sbr.rel (%p39) target = $region21
    $region20: #{tpu_custom_call.1} parent=1 // pred_region
      %42 = vst [vmem:[#allocation2] sm:$0xff] 0.0
      %43 = vst [vmem:[#allocation2 + $0x8] sm:$0xff] 0.0
      %44 = vst [vmem:[#allocation2 + $0x10] sm:$0xff] 0.0
      %45 = vst [vmem:[#allocation2 + $0x18] sm:$0xff] 0.0
    $region21: #{tpu_custom_call.1} parent=1 // pred_fallthru
      _
    %p46 = scmp.ne.s32.totalorder 0, 0
    // Predicated region
    $region22: #{tpu_custom_call.1} parent=1 // pred_check
      %p47 = pneg %p46
    $region23: #{tpu_custom_call.1} parent=1 // pred_check_branch
      %49 = sbr.rel (%p47) target = $region25
    $region24: #{tpu_custom_call.1} parent=1 // pred_region
      %v50 = vld [vmem:[#allocation3] sm:$0xff]
      %v51 = vld [vmem:[#allocation3 + $0x8] sm:$0xff]
      %v52 = vld [vmem:[#allocation3 + $0x10] sm:$0xff]
      %v53 = vld [vmem:[#allocation3 + $0x18] sm:$0xff]
      %v54 = vld [vmem:[#allocation6] sm:$0xff]
      %v55 = vunpack.c.0.s8 %v54
      %v56 = vunpack.c.1.s8 %v54
      %v57 = vunpack.c.2.s8 %v54
      %v58 = vunpack.c.3.s8 %v54
      %v59 = vcvt.s32.f32 %v55
      %v60 = vcvt.s32.f32 %v56
      %v61 = vcvt.s32.f32 %v57
      %v62 = vcvt.s32.f32 %v58
      %v63 = vand.u32 2147483647, %v50
      %v64 = vand.u32 2147483647, %v51
      %v65 = vand.u32 2147483647, %v52
      %v66 = vand.u32 2147483647, %v53
      %v67 = vsub.f32 0.0, %v63
      %v68 = vsub.f32 0.0, %v64
      %v69 = vsub.f32 0.0, %v65
      %v70 = vsub.f32 0.0, %v66
      %v71 = vmul.f32 %v67, 1.442695
      %v72 = vpow.pop %v71
      %v73 = vmul.f32 %v68, 1.442695
      %v74 = vpow.pop %v73
      %v75 = vmul.f32 %v69, 1.442695
      %v76 = vpow.pop %v75
      %v77 = vmul.f32 %v70, 1.442695
      %v78 = vpow.pop %v77
      %vm79 = vcmp.ge.f32.partialorder %v50, 0.0
      %vm80 = vcmp.ge.f32.partialorder %v51, 0.0
      %vm81 = vcmp.ge.f32.partialorder %v52, 0.0
      %vm82 = vcmp.ge.f32.partialorder %v53, 0.0
      %v83 = vsel %vm79, 1.0, %v72
      %v84 = vsel %vm80, 1.0, %v74
      %v85 = vsel %vm81, 1.0, %v76
      %v86 = vsel %vm82, 1.0, %v78
      %v87 = vadd.f32 %v72, 1.0
      %v88 = vadd.f32 %v74, 1.0
      %v89 = vadd.f32 %v76, 1.0
      %v90 = vadd.f32 %v78, 1.0
      %v91 = vrcp.pop %v87
      %v92 = vmul.f32 %v83, %v91
      %v93 = vrcp.pop %v88
      %v94 = vmul.f32 %v84, %v93
      %v95 = vrcp.pop %v89
      %v96 = vmul.f32 %v85, %v95
      %v97 = vrcp.pop %v90
      %v98 = vmul.f32 %v86, %v97
      %v99 = vmax.f32 %v50, 0.0
      %v100 = vmax.f32 %v51, 0.0
      %v101 = vmax.f32 %v52, 0.0
      %v102 = vmax.f32 %v53, 0.0
      %v103 = vmul.f32 %v50, %v59
      %v104 = vmul.f32 %v51, %v60
      %v105 = vmul.f32 %v52, %v61
      %v106 = vmul.f32 %v53, %v62
      %v107 = vsub.f32 %v99, %v103
      %v108 = vsub.f32 %v100, %v104
      %v109 = vsub.f32 %v101, %v105
      %v110 = vsub.f32 %v102, %v106
      %v111 = vadd.f32 %v72, 1.0
      %v112 = vlog2.pop %v111
      %v113 = vmul.f32 %v112, 0.6931472
      %v114 = vmul.f32 -0.5, %v72
      %v115 = vadd.f32 %v114, 1.0
      %v116 = vmul.f32 %v115, %v72
      %v117 = vand.u32 2147483647, %v72
      %vm118 = vcmp.lt.f32.partialorder %v117, 0.0004427343
      %v119 = vsel %vm118, %v116, %v113
      %v120 = vadd.f32 %v74, 1.0
      %v121 = vlog2.pop %v120
      %v122 = vmul.f32 %v121, 0.6931472
      %v123 = vmul.f32 -0.5, %v74
      %v124 = vadd.f32 %v123, 1.0
      %v125 = vmul.f32 %v124, %v74
      %v126 = vand.u32 2147483647, %v74
      %vm127 = vcmp.lt.f32.partialorder %v126, 0.0004427343
      %v128 = vsel %vm127, %v125, %v122
      %v129 = vadd.f32 %v76, 1.0
      %v130 = vlog2.pop %v129
      %v131 = vmul.f32 %v130, 0.6931472
      %v132 = vmul.f32 -0.5, %v76
      %v133 = vadd.f32 %v132, 1.0
      %v134 = vmul.f32 %v133, %v76
      %v135 = vand.u32 2147483647, %v76
      %vm136 = vcmp.lt.f32.partialorder %v135, 0.0004427343
      %v137 = vsel %vm136, %v134, %v131
      %v138 = vadd.f32 %v78, 1.0
      %v139 = vlog2.pop %v138
      %v140 = vmul.f32 %v139, 0.6931472
      %v141 = vmul.f32 -0.5, %v78
      %v142 = vadd.f32 %v141, 1.0
      %v143 = vmul.f32 %v142, %v78
      %v144 = vand.u32 2147483647, %v78
      %vm145 = vcmp.lt.f32.partialorder %v144, 0.0004427343
      %v146 = vsel %vm145, %v143, %v140
      %v147 = vadd.f32 %v107, %v119
      %v148 = vadd.f32 %v108, %v128
      %v149 = vadd.f32 %v109, %v137
      %v150 = vadd.f32 %v110, %v146
      %v151 = vadd.f32 %v147, %v148
      %v152 = vadd.f32 %v151, %v149
      %v153 = vadd.f32 %v152, %v150
      %v154 = vadd.f32 %v153, 0.0
      %v155 = vadd.f32 %v92, %v94
      %v156 = vadd.f32 %v155, %v96
      %v157 = vadd.f32 %v156, %v98
      %v158 = vadd.f32 %v157, 0.0
      %v159 = vadd.f32 %v59, %v60
      %v160 = vadd.f32 %v159, %v61
      %v161 = vadd.f32 %v160, %v62
      %v162 = vadd.f32 %v161, 0.0
      %v163 = vmul.f32 %v59, %v92
      %v164 = vmul.f32 %v60, %v94
      %v165 = vmul.f32 %v61, %v96
      %v166 = vmul.f32 %v62, %v98
      %v167 = vadd.f32 %v163, %v164
      %v168 = vadd.f32 %v167, %v165
      %v169 = vadd.f32 %v168, %v166
      %v170 = vadd.f32 %v169, 0.0
      %v171 = vld [vmem:[#allocation2] sm:$0xff]
      %v172 = vadd.f32 %v171, %v154
      %173 = vst [vmem:[#allocation2] sm:$0xff] %v172
      %s174 = scalar_lea.vmem [#allocation2], 8
      %v175 = vld [vmem:[%s174] sm:$0xff]
      %v176 = vadd.f32 %v175, %v158
      %177 = vst [vmem:[%s174] sm:$0xff] %v176
      %s178 = scalar_lea.vmem [#allocation2], 16
      %v179 = vld [vmem:[%s178] sm:$0xff]
      %v180 = vadd.f32 %v179, %v162
      %181 = vst [vmem:[%s178] sm:$0xff] %v180
      %s182 = scalar_lea.vmem [#allocation2], 24
      %v183 = vld [vmem:[%s182] sm:$0xff]
      %v184 = vadd.f32 %v183, %v170
      %185 = vst [vmem:[%s182] sm:$0xff] %v184
    $region25: #{tpu_custom_call.1} parent=1 // pred_fallthru
      _
    // Predicated region
    $region26: #{tpu_custom_call.1} parent=1 // pred_check
      %p186 = pneg %p38
    $region27: #{tpu_custom_call.1} parent=1 // pred_check_branch
      %188 = sbr.rel (%p186) target = $region29
    $region28: #{tpu_custom_call.1} parent=1 // pred_region
      %v189 = vlaneseq
      %v190 = vshrl.u32 %v189, 7
      %v191 = vadd.s32 %v190, 8
      %v192 = vadd.s32 %v190, 16
      %v193 = vadd.s32 %v190, 24
      %v194 = vmul.u32 %v190, 128
      %v195 = vmul.u32 %v191, 128
      %v196 = vmul.u32 %v192, 128
      %v197 = vmul.u32 %v193, 128
      %v198 = vlaneseq
      %v199 = vand.u32 %v198, 127
      %v200 = vadd.s32 %v194, %v199
      %v201 = vadd.s32 %v195, %v199
      %v202 = vadd.s32 %v196, %v199
      %v203 = vadd.s32 %v197, %v199
      %s204 = smul.u32 0, 4096
      %v205 = vld [vmem:[#allocation3] sm:$0xff]
      %v206 = vld [vmem:[#allocation3 + $0x8] sm:$0xff]
      %v207 = vld [vmem:[#allocation3 + $0x10] sm:$0xff]
      %v208 = vld [vmem:[#allocation3 + $0x18] sm:$0xff]
      %v209 = vld [vmem:[#allocation6] sm:$0xff]
      %v210 = vunpack.c.0.s8 %v209
      %v211 = vunpack.c.1.s8 %v209
      %v212 = vunpack.c.2.s8 %v209
      %v213 = vunpack.c.3.s8 %v209
      %v214 = vcvt.s32.f32 %v210
      %v215 = vcvt.s32.f32 %v211
      %v216 = vcvt.s32.f32 %v212
      %v217 = vcvt.s32.f32 %v213
      %s218 = ssub.s32 2048, %s204
      %v219 = vstv %s218
      %vm220 = vcmp.lt.s32.totalorder %v200, %v219
      %vm221 = vcmp.lt.s32.totalorder %v201, %v219
      %vm222 = vcmp.lt.s32.totalorder %v202, %v219
      %vm223 = vcmp.lt.s32.totalorder %v203, %v219
      %v224 = vsel %vm220, %v205, -1e+09
      %v225 = vsel %vm221, %v206, -1e+09
      %v226 = vsel %vm222, %v207, -1e+09
      %v227 = vsel %vm223, %v208, -1e+09
      %v228 = vsel %vm220, %v214, 0.0
      %v229 = vsel %vm221, %v215, 0.0
      %v230 = vsel %vm222, %v216, 0.0
      %v231 = vsel %vm223, %v217, 0.0
      %v232 = vand.u32 2147483647, %v224
      %v233 = vand.u32 2147483647, %v225
      %v234 = vand.u32 2147483647, %v226
      %v235 = vand.u32 2147483647, %v227
      %v236 = vsub.f32 0.0, %v232
      %v237 = vsub.f32 0.0, %v233
      %v238 = vsub.f32 0.0, %v234
      %v239 = vsub.f32 0.0, %v235
      %v240 = vmul.f32 %v236, 1.442695
      %v241 = vpow.pop %v240
      %v242 = vmul.f32 %v237, 1.442695
      %v243 = vpow.pop %v242
      %v244 = vmul.f32 %v238, 1.442695
      %v245 = vpow.pop %v244
      %v246 = vmul.f32 %v239, 1.442695
      %v247 = vpow.pop %v246
      %vm248 = vcmp.ge.f32.partialorder %v224, 0.0
      %vm249 = vcmp.ge.f32.partialorder %v225, 0.0
      %vm250 = vcmp.ge.f32.partialorder %v226, 0.0
      %vm251 = vcmp.ge.f32.partialorder %v227, 0.0
      %v252 = vsel %vm248, 1.0, %v241
      %v253 = vsel %vm249, 1.0, %v243
      %v254 = vsel %vm250, 1.0, %v245
      %v255 = vsel %vm251, 1.0, %v247
      %v256 = vadd.f32 %v241, 1.0
      %v257 = vadd.f32 %v243, 1.0
      %v258 = vadd.f32 %v245, 1.0
      %v259 = vadd.f32 %v247, 1.0
      %v260 = vrcp.pop %v256
      %v261 = vmul.f32 %v252, %v260
      %v262 = vrcp.pop %v257
      %v263 = vmul.f32 %v253, %v262
      %v264 = vrcp.pop %v258
      %v265 = vmul.f32 %v254, %v264
      %v266 = vrcp.pop %v259
      %v267 = vmul.f32 %v255, %v266
      %v268 = vmax.f32 %v224, 0.0
      %v269 = vmax.f32 %v225, 0.0
      %v270 = vmax.f32 %v226, 0.0
      %v271 = vmax.f32 %v227, 0.0
      %v272 = vmul.f32 %v224, %v228
      %v273 = vmul.f32 %v225, %v229
      %v274 = vmul.f32 %v226, %v230
      %v275 = vmul.f32 %v227, %v231
      %v276 = vsub.f32 %v268, %v272
      %v277 = vsub.f32 %v269, %v273
      %v278 = vsub.f32 %v270, %v274
      %v279 = vsub.f32 %v271, %v275
      %v280 = vadd.f32 %v241, 1.0
      %v281 = vlog2.pop %v280
      %v282 = vmul.f32 %v281, 0.6931472
      %v283 = vmul.f32 -0.5, %v241
      %v284 = vadd.f32 %v283, 1.0
      %v285 = vmul.f32 %v284, %v241
      %v286 = vand.u32 2147483647, %v241
      %vm287 = vcmp.lt.f32.partialorder %v286, 0.0004427343
      %v288 = vsel %vm287, %v285, %v282
      %v289 = vadd.f32 %v243, 1.0
      %v290 = vlog2.pop %v289
      %v291 = vmul.f32 %v290, 0.6931472
      %v292 = vmul.f32 -0.5, %v243
      %v293 = vadd.f32 %v292, 1.0
      %v294 = vmul.f32 %v293, %v243
      %v295 = vand.u32 2147483647, %v243
      %vm296 = vcmp.lt.f32.partialorder %v295, 0.0004427343
      %v297 = vsel %vm296, %v294, %v291
      %v298 = vadd.f32 %v245, 1.0
      %v299 = vlog2.pop %v298
      %v300 = vmul.f32 %v299, 0.6931472
      %v301 = vmul.f32 -0.5, %v245
      %v302 = vadd.f32 %v301, 1.0
      %v303 = vmul.f32 %v302, %v245
      %v304 = vand.u32 2147483647, %v245
      %vm305 = vcmp.lt.f32.partialorder %v304, 0.0004427343
      %v306 = vsel %vm305, %v303, %v300
      %v307 = vadd.f32 %v247, 1.0
      %v308 = vlog2.pop %v307
      %v309 = vmul.f32 %v308, 0.6931472
      %v310 = vmul.f32 -0.5, %v247
      %v311 = vadd.f32 %v310, 1.0
      %v312 = vmul.f32 %v311, %v247
      %v313 = vand.u32 2147483647, %v247
      %vm314 = vcmp.lt.f32.partialorder %v313, 0.0004427343
      %v315 = vsel %vm314, %v312, %v309
      %v316 = vadd.f32 %v276, %v288
      %v317 = vadd.f32 %v277, %v297
      %v318 = vadd.f32 %v278, %v306
      %v319 = vadd.f32 %v279, %v315
      %v320 = vadd.f32 %v316, %v317
      %v321 = vadd.f32 %v320, %v318
      %v322 = vadd.f32 %v321, %v319
      %v323 = vadd.f32 %v322, 0.0
      %v324 = vadd.f32 %v261, %v263
      %v325 = vadd.f32 %v324, %v265
      %v326 = vadd.f32 %v325, %v267
      %v327 = vadd.f32 %v326, 0.0
      %v328 = vadd.f32 %v228, %v229
      %v329 = vadd.f32 %v328, %v230
      %v330 = vadd.f32 %v329, %v231
      %v331 = vadd.f32 %v330, 0.0
      %v332 = vmul.f32 %v228, %v261
      %v333 = vmul.f32 %v229, %v263
      %v334 = vmul.f32 %v230, %v265
      %v335 = vmul.f32 %v231, %v267
      %v336 = vadd.f32 %v332, %v333
      %v337 = vadd.f32 %v336, %v334
      %v338 = vadd.f32 %v337, %v335
      %v339 = vadd.f32 %v338, 0.0
      %v340 = vld [vmem:[#allocation2] sm:$0xff]
      %v341 = vadd.f32 %v340, %v323
      %342 = vst [vmem:[#allocation2] sm:$0xff] %v341
      %s343 = scalar_lea.vmem [#allocation2], 8
      %v344 = vld [vmem:[%s343] sm:$0xff]
      %v345 = vadd.f32 %v344, %v327
      %346 = vst [vmem:[%s343] sm:$0xff] %v345
      %s347 = scalar_lea.vmem [#allocation2], 16
      %v348 = vld [vmem:[%s347] sm:$0xff]
      %v349 = vadd.f32 %v348, %v331
      %350 = vst [vmem:[%s347] sm:$0xff] %v349
      %s351 = scalar_lea.vmem [#allocation2], 24
      %v352 = vld [vmem:[%s351] sm:$0xff]
      %v353 = vadd.f32 %v352, %v339
      %354 = vst [vmem:[%s351] sm:$0xff] %v353
      %v355 = vld [vmem:[#allocation2] sm:$0xff]
      %356 = vadd.xlane.f32.xlu0 %v355
      %v357 = vpop.xlane.xlu0 %356
      %v358 = vrot.slane %v357, 4
      %v359 = vadd.f32 %v357, %v358
      %v360 = vrot.slane %v359, 2
      %v361 = vadd.f32 %v359, %v360
      %v362 = vrot.slane %v361, 1
      %v363 = vadd.f32 %v361, %v362
      %s364 = vtos %v363
      %v365 = vrcp.pop 2048.0
      %s366 = vtos %v365
      %s367 = smul.f32 %s364, %s366
      %v368 = vld [vmem:[%s343] sm:$0xff]
      %369 = vadd.xlane.f32.xlu0 %v368
      %v370 = vpop.xlane.xlu0 %369
      %v371 = vrot.slane %v370, 4
      %v372 = vadd.f32 %v370, %v371
      %v373 = vrot.slane %v372, 2
      %v374 = vadd.f32 %v372, %v373
      %v375 = vrot.slane %v374, 1
      %v376 = vadd.f32 %v374, %v375
      %s377 = vtos %v376
      %v378 = vld [vmem:[%s347] sm:$0xff]
      %379 = vadd.xlane.f32.xlu0 %v378
      %v380 = vpop.xlane.xlu0 %379
      %v381 = vrot.slane %v380, 4
      %v382 = vadd.f32 %v380, %v381
      %v383 = vrot.slane %v382, 2
      %v384 = vadd.f32 %v382, %v383
      %v385 = vrot.slane %v384, 1
      %v386 = vadd.f32 %v384, %v385
      %s387 = vtos %v386
      %v388 = vld [vmem:[%s351] sm:$0xff]
      %389 = vadd.xlane.f32.xlu0 %v388
      %v390 = vpop.xlane.xlu0 %389
      %v391 = vrot.slane %v390, 4
      %v392 = vadd.f32 %v390, %v391
      %v393 = vrot.slane %v392, 2
      %v394 = vadd.f32 %v392, %v393
      %v395 = vrot.slane %v394, 1
      %v396 = vadd.f32 %v394, %v395
      %s397 = vtos %v396
      %s398 = ssub.f32 %s377, %s397
      %s399 = ssub.f32 %s387, %s397
      %s400 = smul.f32 %s397, 2.0
      %s401 = sadd.f32 %s400, 1e-07
      %s402 = sadd.f32 %s400, %s399
      %s403 = sadd.f32 %s402, %s398
      %s404 = sadd.f32 %s403, 1e-07
      %v405 = vstv %s404
      %v406 = vrcp.pop %v405
      %s407 = vtos %v406
      %s408 = smul.f32 %s401, %s407
      %s409 = ssub.f32 1.0, %s408
      %s410 = sadd.f32 %s367, %s409
      %s411 = scalar_lea.smem [#allocation8], 0
      %412 = sst [smem:[%s411]] %s410
    $region29: #{tpu_custom_call.1} parent=1 // pred_fallthru
      _
    // Predicated region
    $region30: #{tpu_custom_call.1} parent=1 // pred_check
      _
    $region31: #{tpu_custom_call.1} parent=1 // pred_check_branch
      %414 = sbr.rel (0) target = $region33
    $region32: #{tpu_custom_call.1} parent=1 // pred_region
      %s416 = ssub.s32 16, 16
      %417 = vsyncadd [#allocation5], %s416
      %420 = dma.smem_to_hbm [#allocation8], 16, %s2, [#allocation5]
    $region33: #{tpu_custom_call.1} parent=1 // pred_fallthru
      _
    // Predicated region
    $region34: #{tpu_custom_call.1} parent=1 // pred_check
      _
    $region35: #{tpu_custom_call.1} parent=1 // pred_check_branch
      %422 = sbr.rel (0) target = $region37
    $region36: #{tpu_custom_call.1} parent=1 // pred_region
      %423 = dma.done [#allocation5], 16
    $region37: #{tpu_custom_call.1} parent=1 // pred_fallthru
      _
    %424 = sfence
    %425 = vsyncpa [#allocation4], 1
    %426 = vsyncpa [#allocation7], 1
    %427 = vsyncpa [#allocation5], 1

</llo_original>
